<compile_context>
chip_gen: v5e
topology: v5e:2x2
jax: 0.10.0
libtpu: 0.0.40
codegen_flags: <defaults>
</compile_context>

<pallas_src>
import functools

import jax
import jax.numpy as jnp
from jax.experimental import pallas as pl
from jax.experimental.pallas import tpu as pltpu


def _pos3d_kernel(xe_ref, yz_ref, out_ref):
    """One VPU add per output element, lane-dense stores.

    xe_ref : (tc, h, 1)    col_embed rows, channels-first, h on sublanes (lane splat)
    yz_ref : (tc, w*z)     precomputed row_embed[j] + z_embed[k] table (sublane splat)
    out_ref: (tc, h, w*z)  one batch slice (the batch block dim is squeezed out)
    """
    out_ref[...] = xe_ref[...] + yz_ref[...][:, None, :]


def _vmem_capacity_bytes():
    """Chip VMEM per TensorCore; conservative (v7x) fallback if query fails."""
    try:
        return pltpu.get_tpu_info().vmem_capacity_bytes
    except Exception:
        return 64 << 20


def _pick_tc(C, h, wz, itemsize=4):
    """Channel tile: largest divisor of C (multiple of 8, or C itself) whose
    DOUBLE-BUFFERED output block stays within ~1/4 of the chip's VMEM."""
    budget = _vmem_capacity_bytes() // 8      # 2x out buffers -> <= VMEM/4 for output
    blk = lambda tc: tc * h * wz * itemsize
    if blk(C) <= budget:
        return C                               # whole channel axis in one block
    cands = [tc for tc in range(8, C, 8) if C % tc == 0]
    fitting = [tc for tc in cands if blk(tc) <= budget]
    if fitting:
        return max(fitting)
    if cands:                                  # best effort: smallest legal tile
        return min(cands)
    return C                                   # no multiple-of-8 divisor: full block


@functools.partial(jax.jit, static_argnames=("bs", "h", "w", "z"))
def learned_3d_positional_encoding(col_w, row_w, z_w, *, bs, h, w, z):
    """Pallas-backed forward of Learned3DPositionalEncoding.

    col_w: [col_num_embed, C]   (nn.Embedding weight of col_embed, C = 2*num_feats)
    row_w: [row_num_embed, C]
    z_w  : [z_num_embed,   C]
    Returns pos3d of shape [bs, C, h, w, z], dtype float32.
    """
    if h != w:
        raise ValueError(f"reference .view() semantics require h == w, got h={h}, w={w}")
    if col_w.shape[0] < w:
        raise ValueError(f"col_num_embed={col_w.shape[0]} < w={w}")
    if row_w.shape[0] < h:
        raise ValueError(f"row_num_embed={row_w.shape[0]} < h={h}")
    if z_w.shape[0] < z:
        raise ValueError(f"z_num_embed={z_w.shape[0]} < z={z}")
    if not (col_w.shape[1] == row_w.shape[1] == z_w.shape[1]):
        raise ValueError("col/row/z embedding feature dims must agree")

    C = col_w.shape[1]
    wz = w * z

    # arange-indexed nn.Embedding lookup == leading-row slice (tiny glue).
    # Channels-first so the kernel emits the final [C, h, w, z] layout directly.
    xe = col_w[:h].T[:, :, None]                    # [C, h, 1]  (col rows -> h axis)
    yz = (row_w[:w].T[:, :, None]                   # [C, w, 1]  (row rows -> w axis)
          + z_w[:z].T[:, None, :]).reshape(C, wz)   # [C, w*z]   lane-dense pairwise table

    tc = _pick_tc(C, h, wz)
    nc = C // tc

    # TODO(synk): if w*z is not a multiple of 128, stores fall back to masked
    # vst; fold h into the lane axis (block [tc, h*w*z]) for such configs.
    pos_flat = pl.pallas_call(
        _pos3d_kernel,
        out_shape=jax.ShapeDtypeStruct((bs, C, h, wz), jnp.float32),
        grid_spec=pltpu.PrefetchScalarGridSpec(
            num_scalar_prefetch=0,
            # bs innermost: input block indices are constant across it, so the
            # tiny tables stay VMEM-resident for the whole grid (nc fetches max).
            grid=(nc, bs),
            in_specs=[
                pl.BlockSpec((tc, h, 1), lambda c, b: (c, 0, 0)),
                pl.BlockSpec((tc, wz), lambda c, b: (c, 0)),
            ],
            out_specs=pl.BlockSpec((None, tc, h, wz), lambda c, b: (b, c, 0, 0)),
        ),
        compiler_params=pltpu.CompilerParams(
            dimension_semantics=("parallel", "parallel"),
        ),
        cost_estimate=pl.CostEstimate(
            flops=bs * C * h * wz,
            transcendentals=0,
            bytes_accessed=4 * (bs * C * h * wz + C * h + C * wz),
        ),
    )(xe, yz)

    # [bs, C, h, w*z] -> [bs, C, h, w, z] is a free contiguous view (no transpose).
    return pos_flat.reshape(bs, C, h, w, z)


if __name__ == "__main__":
    # Module config (small): num_feats=16 -> C = 2*num_feats = 32
    num_feats = 16
    C = 2 * num_feats
    row_num_embed = 50
    col_num_embed = 50
    z_num_embed = 8

    # Deterministic "uniform_init" of the three nn.Embedding weights
    key = jax.random.PRNGKey(0)
    k_row, k_col, k_z = jax.random.split(key, 3)
    row_w = jax.random.uniform(k_row, (row_num_embed, C), dtype=jnp.float32)
    col_w = jax.random.uniform(k_col, (col_num_embed, C), dtype=jnp.float32)
    z_w = jax.random.uniform(k_z, (z_num_embed, C), dtype=jnp.float32)

    # forward(bs, h, w, z, device)
    bs, h, w, z = 2, 16, 16, 8

    pos = learned_3d_positional_encoding(col_w, row_w, z_w, bs=bs, h=h, w=w, z=z)
    pos = jax.block_until_ready(pos)

    # Pure-JAX reference mirroring the PyTorch code exactly (h == w)
    x_embed = col_w[:w]
    y_embed = row_w[:h]
    ze = z_w[:z]
    ref = (x_embed[:, None, None, :]
           + y_embed[None, :, None, :]
           + ze[None, None, :, :])                      # [h, w, z, C]
    ref = jnp.transpose(ref, (3, 0, 1, 2))              # [C, h, w, z]
    ref = jnp.broadcast_to(ref[None], (bs, C, h, w, z))

    assert pos.shape == (bs, C, h, w, z), pos.shape
    assert pos.dtype == jnp.float32
    assert jnp.allclose(pos, ref, atol=1e-6, rtol=1e-6)

    print("KERNEL_OK")
</pallas_src>

<mosaic_0001>
module attributes {stable_mosaic.version = 11 : i64} {
  func.func @_pos3d_kernel(%arg0: i32, %arg1: i32, %arg2: memref<32x16x1xf32, #tpu.memory_space<vmem>>, %arg3: memref<32x128xf32, #tpu.memory_space<vmem>>, %arg4: memref<1x32x16x128xf32, #tpu.memory_space<vmem>>) attributes {dimension_semantics = [#tpu.dimension_semantics<parallel>, #tpu.dimension_semantics<parallel>], iteration_bounds = array<i64: 1, 2>, scalar_prefetch = 0 : i64, scratch_operands = 0 : i64, tpu.core_type = #tpu.core_type<tc>, window_params = [{transform_indices = @transform_0, window_bounds = array<i64: 32, 16, 1>}, {transform_indices = @transform_1, window_bounds = array<i64: 32, 128>}, {transform_indices = @transform_2, window_bounds = array<i64: 1, 32, 16, 128>}]} {
    %c0 = arith.constant 0 : index
    %c0_0 = arith.constant 0 : index
    %c0_1 = arith.constant 0 : index
    %0 = vector.load %arg2[%c0, %c0_0, %c0_1] : memref<32x16x1xf32, #tpu.memory_space<vmem>>, vector<32x16x1xf32>
    %c0_2 = arith.constant 0 : index
    %c0_3 = arith.constant 0 : index
    %1 = vector.load %arg3[%c0_2, %c0_3] : memref<32x128xf32, #tpu.memory_space<vmem>>, vector<32x128xf32>
    %2 = vector.shape_cast %1 : vector<32x128xf32> to vector<32x1x128xf32>
    %3 = vector.broadcast %0 : vector<32x16x1xf32> to vector<32x16x128xf32>
    %4 = vector.broadcast %2 : vector<32x1x128xf32> to vector<32x16x128xf32>
    %5 = arith.addf %3, %4 : vector<32x16x128xf32>
    %c0_4 = arith.constant 0 : index
    %c0_5 = arith.constant 0 : index
    %c0_6 = arith.constant 0 : index
    %c0_7 = arith.constant 0 : index
    %6 = vector.load %arg4[%c0_4, %c0_5, %c0_6, %c0_7] : memref<1x32x16x128xf32, #tpu.memory_space<vmem>>, vector<1x32x16x128xf32>
    %7 = vector.shape_cast %6 : vector<1x32x16x128xf32> to vector<32x16x128xf32>
    %8 = vector.shape_cast %5 : vector<32x16x128xf32> to vector<1x32x16x128xf32>
    tpu.vector_store %arg4[%c0_4, %c0_5, %c0_6, %c0_7], %8 {strides = array<i32>} : memref<1x32x16x128xf32, #tpu.memory_space<vmem>>, vector<1x32x16x128xf32>,
    return
  }
  func.func @transform_0(%arg0: i32, %arg1: i32) -> (i32, i32, i32) {
    %c0_i32 = arith.constant 0 : i32
    %c0_i32_0 = arith.constant 0 : i32
    %c0_i32_1 = arith.constant 0 : i32
    return %arg0, %c0_i32, %c0_i32_0 : i32, i32, i32
  }
  func.func @transform_1(%arg0: i32, %arg1: i32) -> (i32, i32) {
    %c0_i32 = arith.constant 0 : i32
    %c0_i32_0 = arith.constant 0 : i32
    return %arg0, %c0_i32 : i32, i32
  }
  func.func @transform_2(%arg0: i32, %arg1: i32) -> (i32, i32, i32, i32) {
    %c0_i32 = arith.constant 0 : i32
    %c0_i32_0 = arith.constant 0 : i32
    %c0_i32_1 = arith.constant 0 : i32
    return %arg1, %arg0, %c0_i32, %c0_i32_0 : i32, i32, i32, i32
  }
}

</mosaic_0001>

<llo_original>
// kernel: learned_3d_positional_encoding.1
$region0: #{learned_3d_positional_encoding.1}
  #allocation0 [shape = 'u32[]', space=smem, size = 0x4, offset = 0x4, fixed_abs, tag = 'smem constant byte address 0x4 - core index']
  #allocation1 [shape = 'u32[72,128]{1,0:T(1,128)}', space=vmem, size = 0x9000, scoped, tag = 'internal scratch']
  %s0 = inlined_call_operand.vmem [shape: f32[32,16,1], index: 0, kind: input, shape index: {}]
  %s1 = inlined_call_operand.vmem [shape: f32[32,128], index: 1, kind: input, shape index: {}]
  %s2 = inlined_call_operand.vmem [shape: f32[2,32,16,128], index: 2, kind: output, shape index: {}]
  %s3 = sld [smem:[#allocation0]]
  $region41: #{learned_3d_positional_encoding.1} parent=0
    _
  %s5 = ssub.s32 1, %s3
  %s6 = scalar_select 0, %s5, %s3
  loop: start=0, step=1, limit=4
  $region2: #{learned_3d_positional_encoding.1} parent=0 // loop_pre_header
    _
  $region3: #{learned_3d_positional_encoding.1} parent=0 // loop_header
    %s8 = sphi 0, %s12
    %p9 = scmp.ge.s32.totalorder %s8, 4
    %s15 = sphi 0, %s27
    %s16 = sphi 0, %s23
    %s17 = sphi 0, %s15
    %s18 = sphi 0, %s16
    %s19 = sphi 0, %s17
    %s20 = sphi 0, %s18
    %s30 = sphi 0, %s32
    %s33 = sphi 0, %s30
    %s34 = sphi 0, %s33
    %s50 = sphi 0, %s34
    %s56 = sphi 0, %s58
    %s59 = sphi 0, %s56
    %s60 = sphi 0, %s59
    %s76 = sphi 0, %s60
    %s84 = sphi 0, %s86
    %s87 = sphi 0, %s84
    %s88 = sphi 0, %s87
    %s104 = sphi 0, %s88
  $region4: #{learned_3d_positional_encoding.1} parent=0 // loop_header_branch
    %11 = sbr.rel (%p9) target = $region8
  $region5: #{learned_3d_positional_encoding.1} parent=0 // loop_body
    %s13 = ssub.s32 %s8, 1
    %s14 = ssub.s32 %s8, 2
    %s21 = sadd.s32 1, %s16
    %p22 = scmp.ge.s32.totalorder %s21, 2
    %s23 = scalar_select %p22, 0, %s21
    %s24 = sadd.s32 1, %s15
    %s25 = scalar_select %p22, %s24, %s15
    %p26 = scmp.ge.s32.totalorder %s25, 1
    %s27 = scalar_select %p26, 0, %s25
    %s28 = ssub.s32 %s15, %s27
    %p29 = scmp.eq.s32.totalorder %s28, 0
    %s31 = sadd.s32 %s30, 1
    %s32 = scalar_select %p29, %s30, %s31
    %p35 = pneg %p29
    %p36 = scmp.eq.s32.totalorder %s8, 1
    %p37 = por %p35, %p36
    %p38 = scmp.ne.s32.totalorder %s30, %s33
    %p39 = scmp.eq.s32.totalorder %s8, 0
    %p40 = por %p38, %p39
    %p41 = scmp.ne.s32.totalorder %s30, %s33
    %p42 = scmp.eq.s32.totalorder %s13, 1
    %p43 = por %p41, %p42
    %p44 = scmp.ne.s32.totalorder %s33, %s34
    %p45 = scmp.eq.s32.totalorder %s13, 0
    %p46 = por %p44, %p45
    %p47 = scmp.ne.s32.totalorder %s33, %s34
    %p48 = scmp.eq.s32.totalorder %s14, 1
    %p49 = por %p47, %p48
    %p51 = scmp.ne.s32.totalorder %s34, %s50
    %p52 = scmp.eq.s32.totalorder %s14, 0
    %p53 = por %p51, %p52
    %s54 = ssub.s32 %s15, %s27
    %p55 = scmp.eq.s32.totalorder %s54, 0
    %s57 = sadd.s32 %s56, 1
    %s58 = scalar_select %p55, %s56, %s57
    %p61 = pneg %p55
    %p62 = scmp.eq.s32.totalorder %s8, 1
    %p63 = por %p61, %p62
    %p64 = scmp.ne.s32.totalorder %s56, %s59
    %p65 = scmp.eq.s32.totalorder %s8, 0
    %p66 = por %p64, %p65
    %p67 = scmp.ne.s32.totalorder %s56, %s59
    %p68 = scmp.eq.s32.totalorder %s13, 1
    %p69 = por %p67, %p68
    %p70 = scmp.ne.s32.totalorder %s59, %s60
    %p71 = scmp.eq.s32.totalorder %s13, 0
    %p72 = por %p70, %p71
    %p73 = scmp.ne.s32.totalorder %s59, %s60
    %p74 = scmp.eq.s32.totalorder %s14, 1
    %p75 = por %p73, %p74
    %p77 = scmp.ne.s32.totalorder %s60, %s76
    %p78 = scmp.eq.s32.totalorder %s14, 0
    %p79 = por %p77, %p78
    %s80 = ssub.s32 %s16, %s23
    %s81 = ssub.s32 %s15, %s27
    %s82 = sor.u32 %s80, %s81
    %p83 = scmp.eq.s32.totalorder %s82, 0
    %s85 = sadd.s32 %s84, 1
    %s86 = scalar_select %p83, %s84, %s85
    %p89 = pneg %p83
    %p90 = scmp.eq.s32.totalorder %s8, 1
    %p91 = por %p89, %p90
    %p92 = scmp.ne.s32.totalorder %s84, %s87
    %p93 = scmp.eq.s32.totalorder %s8, 0
    %p94 = por %p92, %p93
    %p95 = scmp.ne.s32.totalorder %s84, %s87
    %p96 = scmp.eq.s32.totalorder %s13, 1
    %p97 = por %p95, %p96
    %p98 = scmp.ne.s32.totalorder %s87, %s88
    %p99 = scmp.eq.s32.totalorder %s13, 0
    %p100 = por %p98, %p99
    %p101 = scmp.ne.s32.totalorder %s87, %s88
    %p102 = scmp.eq.s32.totalorder %s14, 1
    %p103 = por %p101, %p102
    %p105 = scmp.ne.s32.totalorder %s88, %s104
    %p106 = scmp.eq.s32.totalorder %s14, 0
    %p107 = por %p105, %p106
    %p108 = scmp.le.s32.totalorder 1, %s8
    %p109 = scmp.lt.s32.totalorder %s8, 3
    %p110 = pnand %p108, %p109
    %p111 = pneg %p110
    // Predicated region
    $region9: #{learned_3d_positional_encoding.1} parent=5 // pred_check
      _
    $region10: #{learned_3d_positional_encoding.1} parent=5 // pred_check_branch
      %113 = sbr.rel (%p110) target = $region12
    $region11: #{learned_3d_positional_encoding.1} parent=5 // pred_region
      %s114 = ssub.s32 %s8, 1
      // Predicated region
      $region13: #{learned_3d_positional_encoding.1} parent=11 // pred_check
        %p115 = pneg %p46
      $region14: #{learned_3d_positional_encoding.1} parent=11 // pred_check_branch
        %117 = sbr.rel (%p115) target = $region16
      $region15: #{learned_3d_positional_encoding.1} parent=11 // pred_region
        %s118 = smul.u32 32, %s17
        %p119 = scmp.lt.s32.totalorder %s118, 31
        %s120 = scalar_select %p119, %s118, 31
        %s121 = smul.addr %s120, 2
        %s122 = smul.addr %s121, 8
        %s123 = scalar_lea.vmem %s0, %s122
        %s124 = smul.u32 32, %s17
      $region16: #{learned_3d_positional_encoding.1} parent=11 // pred_fallthru
        _
      // Predicated region
      $region17: #{learned_3d_positional_encoding.1} parent=11 // pred_check
        %p125 = pneg %p72
      $region18: #{learned_3d_positional_encoding.1} parent=11 // pred_check_branch
        %127 = sbr.rel (%p125) target = $region20
      $region19: #{learned_3d_positional_encoding.1} parent=11 // pred_region
        %s128 = smul.u32 4, %s17
        %p129 = scmp.lt.s32.totalorder %s128, 3
        %s130 = scalar_select %p129, %s128, 3
        %s131 = smul.addr %s130, 8
        %s132 = scalar_lea.vmem %s1, %s131
        %s133 = smul.u32 4, %s17
      $region20: #{learned_3d_positional_encoding.1} parent=11 // pred_fallthru
        _
    $region12: #{learned_3d_positional_encoding.1} parent=5 // pred_fallthru
      _
    %p134 = scmp.lt.s32.totalorder %s8, 2
    // Predicated region
    $region21: #{learned_3d_positional_encoding.1} parent=5 // pred_check
      %p135 = pneg %p134
    $region22: #{learned_3d_positional_encoding.1} parent=5 // pred_check_branch
      %137 = sbr.rel (%p135) target = $region24
    $region23: #{learned_3d_positional_encoding.1} parent=5 // pred_region
      _
    $region24: #{learned_3d_positional_encoding.1} parent=5 // pred_fallthru
      _
    %p138 = scmp.le.s32.totalorder 1, %s8
    %p139 = scmp.lt.s32.totalorder %s8, 3
    %p140 = pnand %p138, %p139
    %p141 = pneg %p140
    // Predicated region
    $region25: #{learned_3d_positional_encoding.1} parent=5 // pred_check
      _
    $region26: #{learned_3d_positional_encoding.1} parent=5 // pred_check_branch
      %143 = sbr.rel (%p140) target = $region28
    $region27: #{learned_3d_positional_encoding.1} parent=5 // pred_region
      %s144 = ssub.s32 %s8, 1
      %s145 = smul.u32 32, %s17
      %p146 = scmp.lt.s32.totalorder %s145, 31
      %s147 = scalar_select %p146, %s145, 31
      %s148 = smul.addr %s147, 2
      %s149 = smul.addr %s148, 8
      %s150 = scalar_lea.vmem %s0, %s149
      %p151 = pneg %p46
      %p152 = pneg %p43
      %s153 = smul.u32 4, %s17
      %p154 = scmp.lt.s32.totalorder %s153, 3
      %s155 = scalar_select %p154, %s153, 3
      %s156 = smul.addr %s155, 8
      %s157 = scalar_lea.vmem %s1, %s156
      %p158 = pneg %p72
      %p159 = pneg %p69
      %p160 = pneg %p100
      %p161 = pneg %p97
      %s162 = smul.u32 32, %s17
      %p163 = scmp.lt.s32.totalorder %s18, 1
      %s164 = scalar_select %p163, %s18, 1
      %p165 = scmp.lt.s32.totalorder %s162, 31
      %s166 = scalar_select %p165, %s162, 31
      %s167 = smul.addr %s166, 2
      %s168 = smul.addr %s164, 64
      %s169 = sadd.s32 %s167, %s168
      %s170 = smul.addr %s169, 8
      %s171 = scalar_lea.vmem %s2, %s170
      %s172 = smul.u32 32, %s17
      %p173 = scmp.lt.s32.totalorder %s172, 31
      %s174 = scalar_select %p173, %s172, 31
      %s175 = smul.addr %s174, 2
      %s176 = smul.addr %s175, 8
      %s177 = scalar_lea.vmem %s0, %s176
      %s178 = smul.u32 32, %s17
      %s179 = smul.u32 4, %s17
      %p180 = scmp.lt.s32.totalorder %s179, 3
      %s181 = scalar_select %p180, %s179, 3
      %s182 = smul.addr %s181, 8
      %s183 = scalar_lea.vmem %s1, %s182
      %s184 = smul.u32 4, %s17
      %s185 = smul.u32 32, %s17
      %p186 = scmp.lt.s32.totalorder %s18, 1
      %s187 = scalar_select %p186, %s18, 1
      %p188 = scmp.lt.s32.totalorder %s185, 31
      %s189 = scalar_select %p188, %s185, 31
      %s190 = smul.addr %s189, 2
      %s191 = smul.addr %s187, 64
      %s192 = sadd.s32 %s190, %s191
      %s193 = smul.addr %s192, 8
      %s194 = scalar_lea.vmem %s2, %s193
      %s195 = smul.u32 32, %s17
      %v196 = vld [vmem:[%s177] sm:$0xff]
      %v197 = vld [vmem:[%s177 + $0x8] sm:$0xff]
      %v198 = vld [vmem:[%s177 + $0x10] sm:$0xff]
      %v199 = vld [vmem:[%s177 + $0x18] sm:$0xff]
      %v200 = vld [vmem:[%s177 + $0x20] sm:$0xff]
      %v201 = vld [vmem:[%s177 + $0x28] sm:$0xff]
      %v202 = vld [vmem:[%s177 + $0x30] sm:$0xff]
      %v203 = vld [vmem:[%s177 + $0x38] sm:$0xff]
      %v204 = vld [vmem:[%s177 + $0x40] sm:$0xff]
      %v205 = vld [vmem:[%s177 + $0x48] sm:$0xff]
      %v206 = vld [vmem:[%s177 + $0x50] sm:$0xff]
      %v207 = vld [vmem:[%s177 + $0x58] sm:$0xff]
      %v208 = vld [vmem:[%s177 + $0x60] sm:$0xff]
      %v209 = vld [vmem:[%s177 + $0x68] sm:$0xff]
      %v210 = vld [vmem:[%s177 + $0x70] sm:$0xff]
      %v211 = vld [vmem:[%s177 + $0x78] sm:$0xff]
      %v212 = vld [vmem:[%s177 + $0x80] sm:$0xff]
      %v213 = vld [vmem:[%s177 + $0x88] sm:$0xff]
      %v214 = vld [vmem:[%s177 + $0x90] sm:$0xff]
      %v215 = vld [vmem:[%s177 + $0x98] sm:$0xff]
      %v216 = vld [vmem:[%s177 + $0xa0] sm:$0xff]
      %v217 = vld [vmem:[%s177 + $0xa8] sm:$0xff]
      %v218 = vld [vmem:[%s177 + $0xb0] sm:$0xff]
      %v219 = vld [vmem:[%s177 + $0xb8] sm:$0xff]
      %v220 = vld [vmem:[%s177 + $0xc0] sm:$0xff]
      %v221 = vld [vmem:[%s177 + $0xc8] sm:$0xff]
      %v222 = vld [vmem:[%s177 + $0xd0] sm:$0xff]
      %v223 = vld [vmem:[%s177 + $0xd8] sm:$0xff]
      %v224 = vld [vmem:[%s177 + $0xe0] sm:$0xff]
      %v225 = vld [vmem:[%s177 + $0xe8] sm:$0xff]
      %v226 = vld [vmem:[%s177 + $0xf0] sm:$0xff]
      %v227 = vld [vmem:[%s177 + $0xf8] sm:$0xff]
      %v228 = vld [vmem:[%s177 + $0x100] sm:$0xff]
      %v229 = vld [vmem:[%s177 + $0x108] sm:$0xff]
      %v230 = vld [vmem:[%s177 + $0x110] sm:$0xff]
      %v231 = vld [vmem:[%s177 + $0x118] sm:$0xff]
      %v232 = vld [vmem:[%s177 + $0x120] sm:$0xff]
      %v233 = vld [vmem:[%s177 + $0x128] sm:$0xff]
      %v234 = vld [vmem:[%s177 + $0x130] sm:$0xff]
      %v235 = vld [vmem:[%s177 + $0x138] sm:$0xff]
      %v236 = vld [vmem:[%s177 + $0x140] sm:$0xff]
      %v237 = vld [vmem:[%s177 + $0x148] sm:$0xff]
      %v238 = vld [vmem:[%s177 + $0x150] sm:$0xff]
      %v239 = vld [vmem:[%s177 + $0x158] sm:$0xff]
      %v240 = vld [vmem:[%s177 + $0x160] sm:$0xff]
      %v241 = vld [vmem:[%s177 + $0x168] sm:$0xff]
      %v242 = vld [vmem:[%s177 + $0x170] sm:$0xff]
      %v243 = vld [vmem:[%s177 + $0x178] sm:$0xff]
      %v244 = vld [vmem:[%s177 + $0x180] sm:$0xff]
      %v245 = vld [vmem:[%s177 + $0x188] sm:$0xff]
      %v246 = vld [vmem:[%s177 + $0x190] sm:$0xff]
      %v247 = vld [vmem:[%s177 + $0x198] sm:$0xff]
      %v248 = vld [vmem:[%s177 + $0x1a0] sm:$0xff]
      %v249 = vld [vmem:[%s177 + $0x1a8] sm:$0xff]
      %v250 = vld [vmem:[%s177 + $0x1b0] sm:$0xff]
      %v251 = vld [vmem:[%s177 + $0x1b8] sm:$0xff]
      %v252 = vld [vmem:[%s177 + $0x1c0] sm:$0xff]
      %v253 = vld [vmem:[%s177 + $0x1c8] sm:$0xff]
      %v254 = vld [vmem:[%s177 + $0x1d0] sm:$0xff]
      %v255 = vld [vmem:[%s177 + $0x1d8] sm:$0xff]
      %v256 = vld [vmem:[%s177 + $0x1e0] sm:$0xff]
      %v257 = vld [vmem:[%s177 + $0x1e8] sm:$0xff]
      %v258 = vld [vmem:[%s177 + $0x1f0] sm:$0xff]
      %v259 = vld [vmem:[%s177 + $0x1f8] sm:$0xff]
      %v260 = vld [vmem:[%s183] sm:$0xff]
      %v261 = vld [vmem:[%s183 + $0x8] sm:$0xff]
      %v262 = vld [vmem:[%s183 + $0x10] sm:$0xff]
      %v263 = vld [vmem:[%s183 + $0x18] sm:$0xff]
      %v268 = vrot.slane %v260, 1
      %v269 = vrot.slane %v260, 2
      %v270 = vrot.slane %v260, 3
      %v271 = vrot.slane %v260, 4
      %v272 = vrot.slane %v260, 5
      %v273 = vrot.slane %v260, 6
      %v274 = vrot.slane %v260, 7
      %v275 = vrot.slane %v261, 1
      %v276 = vrot.slane %v261, 2
      %v277 = vrot.slane %v261, 3
      %v278 = vrot.slane %v261, 4
      %v279 = vrot.slane %v261, 5
      %v280 = vrot.slane %v261, 6
      %v281 = vrot.slane %v261, 7
      %v282 = vrot.slane %v262, 1
      %v283 = vrot.slane %v262, 2
      %v284 = vrot.slane %v262, 3
      %v285 = vrot.slane %v262, 4
      %v286 = vrot.slane %v262, 5
      %v287 = vrot.slane %v262, 6
      %v288 = vrot.slane %v262, 7
      %v289 = vrot.slane %v263, 1
      %v290 = vrot.slane %v263, 2
      %v291 = vrot.slane %v263, 3
      %v292 = vrot.slane %v263, 4
      %v293 = vrot.slane %v263, 5
      %v294 = vrot.slane %v263, 6
      %v295 = vrot.slane %v263, 7
      %297 = vset.pattern.permute.xlu0 0
      %298 = vperm.xlu0 %297, %v196
      %v299 = vpop.permute.xlu0 %298
      %302 = vset.pattern.permute.xlu0 0
      %303 = vperm.xlu0 %302, %v197
      %v304 = vpop.permute.xlu0 %303
      %307 = vset.pattern.permute.xlu0 0
      %308 = vperm.xlu0 %307, %v198
      %v309 = vpop.permute.xlu0 %308
      %312 = vset.pattern.permute.xlu0 0
      %313 = vperm.xlu0 %312, %v199
      %v314 = vpop.permute.xlu0 %313
      %317 = vset.pattern.permute.xlu0 0
      %318 = vperm.xlu0 %317, %v200
      %v319 = vpop.permute.xlu0 %318
      %322 = vset.pattern.permute.xlu0 0
      %323 = vperm.xlu0 %322, %v201
      %v324 = vpop.permute.xlu0 %323
      %327 = vset.pattern.permute.xlu0 0
      %328 = vperm.xlu0 %327, %v202
      %v329 = vpop.permute.xlu0 %328
      %332 = vset.pattern.permute.xlu0 0
      %333 = vperm.xlu0 %332, %v203
      %v334 = vpop.permute.xlu0 %333
      %337 = vset.pattern.permute.xlu0 0
      %338 = vperm.xlu0 %337, %v204
      %v339 = vpop.permute.xlu0 %338
      %342 = vset.pattern.permute.xlu0 0
      %343 = vperm.xlu0 %342, %v205
      %v344 = vpop.permute.xlu0 %343
      %347 = vset.pattern.permute.xlu0 0
      %348 = vperm.xlu0 %347, %v206
      %v349 = vpop.permute.xlu0 %348
      %352 = vset.pattern.permute.xlu0 0
      %353 = vperm.xlu0 %352, %v207
      %v354 = vpop.permute.xlu0 %353
      %357 = vset.pattern.permute.xlu0 0
      %358 = vperm.xlu0 %357, %v208
      %v359 = vpop.permute.xlu0 %358
      %362 = vset.pattern.permute.xlu0 0
      %363 = vperm.xlu0 %362, %v209
      %v364 = vpop.permute.xlu0 %363
      %367 = vset.pattern.permute.xlu0 0
      %368 = vperm.xlu0 %367, %v210
      %v369 = vpop.permute.xlu0 %368
      %372 = vset.pattern.permute.xlu0 0
      %373 = vperm.xlu0 %372, %v211
      %v374 = vpop.permute.xlu0 %373
      %377 = vset.pattern.permute.xlu0 0
      %378 = vperm.xlu0 %377, %v212
      %v379 = vpop.permute.xlu0 %378
      %382 = vset.pattern.permute.xlu0 0
      %383 = vperm.xlu0 %382, %v213
      %v384 = vpop.permute.xlu0 %383
      %387 = vset.pattern.permute.xlu0 0
      %388 = vperm.xlu0 %387, %v214
      %v389 = vpop.permute.xlu0 %388
      %392 = vset.pattern.permute.xlu0 0
      %393 = vperm.xlu0 %392, %v215
      %v394 = vpop.permute.xlu0 %393
      %397 = vset.pattern.permute.xlu0 0
      %398 = vperm.xlu0 %397, %v216
      %v399 = vpop.permute.xlu0 %398
      %402 = vset.pattern.permute.xlu0 0
      %403 = vperm.xlu0 %402, %v217
      %v404 = vpop.permute.xlu0 %403
      %407 = vset.pattern.permute.xlu0 0
      %408 = vperm.xlu0 %407, %v218
      %v409 = vpop.permute.xlu0 %408
      %412 = vset.pattern.permute.xlu0 0
      %413 = vperm.xlu0 %412, %v219
      %v414 = vpop.permute.xlu0 %413
      %417 = vset.pattern.permute.xlu0 0
      %418 = vperm.xlu0 %417, %v220
      %v419 = vpop.permute.xlu0 %418
      %422 = vset.pattern.permute.xlu0 0
      %423 = vperm.xlu0 %422, %v221
      %v424 = vpop.permute.xlu0 %423
      %427 = vset.pattern.permute.xlu0 0
      %428 = vperm.xlu0 %427, %v222
      %v429 = vpop.permute.xlu0 %428
      %432 = vset.pattern.permute.xlu0 0
      %433 = vperm.xlu0 %432, %v223
      %v434 = vpop.permute.xlu0 %433
      %437 = vset.pattern.permute.xlu0 0
      %438 = vperm.xlu0 %437, %v224
      %v439 = vpop.permute.xlu0 %438
      %442 = vset.pattern.permute.xlu0 0
      %443 = vperm.xlu0 %442, %v225
      %v444 = vpop.permute.xlu0 %443
      %447 = vset.pattern.permute.xlu0 0
      %448 = vperm.xlu0 %447, %v226
      %v449 = vpop.permute.xlu0 %448
      %452 = vset.pattern.permute.xlu0 0
      %453 = vperm.xlu0 %452, %v227
      %v454 = vpop.permute.xlu0 %453
      %457 = vset.pattern.permute.xlu0 0
      %458 = vperm.xlu0 %457, %v228
      %v459 = vpop.permute.xlu0 %458
      %462 = vset.pattern.permute.xlu0 0
      %463 = vperm.xlu0 %462, %v229
      %v464 = vpop.permute.xlu0 %463
      %467 = vset.pattern.permute.xlu0 0
      %468 = vperm.xlu0 %467, %v230
      %v469 = vpop.permute.xlu0 %468
      %472 = vset.pattern.permute.xlu0 0
      %473 = vperm.xlu0 %472, %v231
      %v474 = vpop.permute.xlu0 %473
      %477 = vset.pattern.permute.xlu0 0
      %478 = vperm.xlu0 %477, %v232
      %v479 = vpop.permute.xlu0 %478
      %482 = vset.pattern.permute.xlu0 0
      %483 = vperm.xlu0 %482, %v233
      %v484 = vpop.permute.xlu0 %483
      %487 = vset.pattern.permute.xlu0 0
      %488 = vperm.xlu0 %487, %v234
      %v489 = vpop.permute.xlu0 %488
      %492 = vset.pattern.permute.xlu0 0
      %493 = vperm.xlu0 %492, %v235
      %v494 = vpop.permute.xlu0 %493
      %497 = vset.pattern.permute.xlu0 0
      %498 = vperm.xlu0 %497, %v236
      %v499 = vpop.permute.xlu0 %498
      %502 = vset.pattern.permute.xlu0 0
      %503 = vperm.xlu0 %502, %v237
      %v504 = vpop.permute.xlu0 %503
      %507 = vset.pattern.permute.xlu0 0
      %508 = vperm.xlu0 %507, %v238
      %v509 = vpop.permute.xlu0 %508
      %512 = vset.pattern.permute.xlu0 0
      %513 = vperm.xlu0 %512, %v239
      %v514 = vpop.permute.xlu0 %513
      %517 = vset.pattern.permute.xlu0 0
      %518 = vperm.xlu0 %517, %v240
      %v519 = vpop.permute.xlu0 %518
      %522 = vset.pattern.permute.xlu0 0
      %523 = vperm.xlu0 %522, %v241
      %v524 = vpop.permute.xlu0 %523
      %527 = vset.pattern.permute.xlu0 0
      %528 = vperm.xlu0 %527, %v242
      %v529 = vpop.permute.xlu0 %528
      %532 = vset.pattern.permute.xlu0 0
      %533 = vperm.xlu0 %532, %v243
      %v534 = vpop.permute.xlu0 %533
      %537 = vset.pattern.permute.xlu0 0
      %538 = vperm.xlu0 %537, %v244
      %v539 = vpop.permute.xlu0 %538
      %542 = vset.pattern.permute.xlu0 0
      %543 = vperm.xlu0 %542, %v245
      %v544 = vpop.permute.xlu0 %543
      %547 = vset.pattern.permute.xlu0 0
      %548 = vperm.xlu0 %547, %v246
      %v549 = vpop.permute.xlu0 %548
      %552 = vset.pattern.permute.xlu0 0
      %553 = vperm.xlu0 %552, %v247
      %v554 = vpop.permute.xlu0 %553
      %557 = vset.pattern.permute.xlu0 0
      %558 = vperm.xlu0 %557, %v248
      %v559 = vpop.permute.xlu0 %558
      %562 = vset.pattern.permute.xlu0 0
      %563 = vperm.xlu0 %562, %v249
      %v564 = vpop.permute.xlu0 %563
      %567 = vset.pattern.permute.xlu0 0
      %568 = vperm.xlu0 %567, %v250
      %v569 = vpop.permute.xlu0 %568
      %572 = vset.pattern.permute.xlu0 0
      %573 = vperm.xlu0 %572, %v251
      %v574 = vpop.permute.xlu0 %573
      %577 = vset.pattern.permute.xlu0 0
      %578 = vperm.xlu0 %577, %v252
      %v579 = vpop.permute.xlu0 %578
      %582 = vset.pattern.permute.xlu0 0
      %583 = vperm.xlu0 %582, %v253
      %v584 = vpop.permute.xlu0 %583
      %587 = vset.pattern.permute.xlu0 0
      %588 = vperm.xlu0 %587, %v254
      %v589 = vpop.permute.xlu0 %588
      %592 = vset.pattern.permute.xlu0 0
      %593 = vperm.xlu0 %592, %v255
      %v594 = vpop.permute.xlu0 %593
      %597 = vset.pattern.permute.xlu0 0
      %598 = vperm.xlu0 %597, %v256
      %v599 = vpop.permute.xlu0 %598
      %602 = vset.pattern.permute.xlu0 0
      %603 = vperm.xlu0 %602, %v257
      %v604 = vpop.permute.xlu0 %603
      %607 = vset.pattern.permute.xlu0 0
      %608 = vperm.xlu0 %607, %v258
      %v609 = vpop.permute.xlu0 %608
      %612 = vset.pattern.permute.xlu0 0
      %613 = vperm.xlu0 %612, %v259
      %v614 = vpop.permute.xlu0 %613
      %v616 = vperm.slane %v260, 0
      %v617 = vperm.slane %v268, 0
      %v618 = vperm.slane %v269, 0
      %v619 = vperm.slane %v270, 0
      %v620 = vperm.slane %v271, 0
      %v621 = vperm.slane %v272, 0
      %v622 = vperm.slane %v273, 0
      %v623 = vperm.slane %v274, 0
      %v624 = vperm.slane %v261, 0
      %v625 = vperm.slane %v275, 0
      %v626 = vperm.slane %v276, 0
      %v627 = vperm.slane %v277, 0
      %v628 = vperm.slane %v278, 0
      %v629 = vperm.slane %v279, 0
      %v630 = vperm.slane %v280, 0
      %v631 = vperm.slane %v281, 0
      %v632 = vperm.slane %v262, 0
      %v633 = vperm.slane %v282, 0
      %v634 = vperm.slane %v283, 0
      %v635 = vperm.slane %v284, 0
      %v636 = vperm.slane %v285, 0
      %v637 = vperm.slane %v286, 0
      %v638 = vperm.slane %v287, 0
      %v639 = vperm.slane %v288, 0
      %v640 = vperm.slane %v263, 0
      %v641 = vperm.slane %v289, 0
      %v642 = vperm.slane %v290, 0
      %v643 = vperm.slane %v291, 0
      %v644 = vperm.slane %v292, 0
      %v645 = vperm.slane %v293, 0
      %v646 = vperm.slane %v294, 0
      %v647 = vperm.slane %v295, 0
      %v680 = vadd.f32 %v299, %v616
      %v681 = vadd.f32 %v304, %v616
      %v682 = vadd.f32 %v309, %v617
      %v683 = vadd.f32 %v314, %v617
      %v684 = vadd.f32 %v319, %v618
      %v685 = vadd.f32 %v324, %v618
      %v686 = vadd.f32 %v329, %v619
      %v687 = vadd.f32 %v334, %v619
      %v688 = vadd.f32 %v339, %v620
      %v689 = vadd.f32 %v344, %v620
      %v690 = vadd.f32 %v349, %v621
      %v691 = vadd.f32 %v354, %v621
      %v692 = vadd.f32 %v359, %v622
      %v693 = vadd.f32 %v364, %v622
      %v694 = vadd.f32 %v369, %v623
      %v695 = vadd.f32 %v374, %v623
      %v696 = vadd.f32 %v379, %v624
      %v697 = vadd.f32 %v384, %v624
      %v698 = vadd.f32 %v389, %v625
      %v699 = vadd.f32 %v394, %v625
      %v700 = vadd.f32 %v399, %v626
      %v701 = vadd.f32 %v404, %v626
      %v702 = vadd.f32 %v409, %v627
      %v703 = vadd.f32 %v414, %v627
      %v704 = vadd.f32 %v419, %v628
      %v705 = vadd.f32 %v424, %v628
      %v706 = vadd.f32 %v429, %v629
      %v707 = vadd.f32 %v434, %v629
      %v708 = vadd.f32 %v439, %v630
      %v709 = vadd.f32 %v444, %v630
      %v710 = vadd.f32 %v449, %v631
      %v711 = vadd.f32 %v454, %v631
      %v712 = vadd.f32 %v459, %v632
      %v713 = vadd.f32 %v464, %v632
      %v714 = vadd.f32 %v469, %v633
      %v715 = vadd.f32 %v474, %v633
      %v716 = vadd.f32 %v479, %v634
      %v717 = vadd.f32 %v484, %v634
      %v718 = vadd.f32 %v489, %v635
      %v719 = vadd.f32 %v494, %v635
      %v720 = vadd.f32 %v499, %v636
      %v721 = vadd.f32 %v504, %v636
      %v722 = vadd.f32 %v509, %v637
      %v723 = vadd.f32 %v514, %v637
      %v724 = vadd.f32 %v519, %v638
      %v725 = vadd.f32 %v524, %v638
      %v726 = vadd.f32 %v529, %v639
      %v727 = vadd.f32 %v534, %v639
      %v728 = vadd.f32 %v539, %v640
      %v729 = vadd.f32 %v544, %v640
      %v730 = vadd.f32 %v549, %v641
      %v731 = vadd.f32 %v554, %v641
      %v732 = vadd.f32 %v559, %v642
      %v733 = vadd.f32 %v564, %v642
      %v734 = vadd.f32 %v569, %v643
      %v735 = vadd.f32 %v574, %v643
      %v736 = vadd.f32 %v579, %v644
      %v737 = vadd.f32 %v584, %v644
      %v738 = vadd.f32 %v589, %v645
      %v739 = vadd.f32 %v594, %v645
      %v740 = vadd.f32 %v599, %v646
      %v741 = vadd.f32 %v604, %v646
      %v742 = vadd.f32 %v609, %v647
      %v743 = vadd.f32 %v614, %v647
      %744 = vst [vmem:[%s194] sm:$0xff] %v680
      %745 = vst [vmem:[%s194 + $0x8] sm:$0xff] %v681
      %746 = vst [vmem:[%s194 + $0x10] sm:$0xff] %v682
      %747 = vst [vmem:[%s194 + $0x18] sm:$0xff] %v683
      %748 = vst [vmem:[%s194 + $0x20] sm:$0xff] %v684
      %749 = vst [vmem:[%s194 + $0x28] sm:$0xff] %v685
      %750 = vst [vmem:[%s194 + $0x30] sm:$0xff] %v686
      %751 = vst [vmem:[%s194 + $0x38] sm:$0xff] %v687
      %752 = vst [vmem:[%s194 + $0x40] sm:$0xff] %v688
      %753 = vst [vmem:[%s194 + $0x48] sm:$0xff] %v689
      %754 = vst [vmem:[%s194 + $0x50] sm:$0xff] %v690
      %755 = vst [vmem:[%s194 + $0x58] sm:$0xff] %v691
      %756 = vst [vmem:[%s194 + $0x60] sm:$0xff] %v692
      %757 = vst [vmem:[%s194 + $0x68] sm:$0xff] %v693
      %758 = vst [vmem:[%s194 + $0x70] sm:$0xff] %v694
      %759 = vst [vmem:[%s194 + $0x78] sm:$0xff] %v695
      %760 = vst [vmem:[%s194 + $0x80] sm:$0xff] %v696
      %761 = vst [vmem:[%s194 + $0x88] sm:$0xff] %v697
      %762 = vst [vmem:[%s194 + $0x90] sm:$0xff] %v698
      %763 = vst [vmem:[%s194 + $0x98] sm:$0xff] %v699
      %764 = vst [vmem:[%s194 + $0xa0] sm:$0xff] %v700
      %765 = vst [vmem:[%s194 + $0xa8] sm:$0xff] %v701
      %766 = vst [vmem:[%s194 + $0xb0] sm:$0xff] %v702
      %767 = vst [vmem:[%s194 + $0xb8] sm:$0xff] %v703
      %768 = vst [vmem:[%s194 + $0xc0] sm:$0xff] %v704
      %769 = vst [vmem:[%s194 + $0xc8] sm:$0xff] %v705
      %770 = vst [vmem:[%s194 + $0xd0] sm:$0xff] %v706
      %771 = vst [vmem:[%s194 + $0xd8] sm:$0xff] %v707
      %772 = vst [vmem:[%s194 + $0xe0] sm:$0xff] %v708
      %773 = vst [vmem:[%s194 + $0xe8] sm:$0xff] %v709
      %774 = vst [vmem:[%s194 + $0xf0] sm:$0xff] %v710
      %775 = vst [vmem:[%s194 + $0xf8] sm:$0xff] %v711
      %776 = vst [vmem:[%s194 + $0x100] sm:$0xff] %v712
      %777 = vst [vmem:[%s194 + $0x108] sm:$0xff] %v713
      %778 = vst [vmem:[%s194 + $0x110] sm:$0xff] %v714
      %779 = vst [vmem:[%s194 + $0x118] sm:$0xff] %v715
      %780 = vst [vmem:[%s194 + $0x120] sm:$0xff] %v716
      %781 = vst [vmem:[%s194 + $0x128] sm:$0xff] %v717
      %782 = vst [vmem:[%s194 + $0x130] sm:$0xff] %v718
      %783 = vst [vmem:[%s194 + $0x138] sm:$0xff] %v719
      %784 = vst [vmem:[%s194 + $0x140] sm:$0xff] %v720
      %785 = vst [vmem:[%s194 + $0x148] sm:$0xff] %v721
      %786 = vst [vmem:[%s194 + $0x150] sm:$0xff] %v722
      %787 = vst [vmem:[%s194 + $0x158] sm:$0xff] %v723
      %788 = vst [vmem:[%s194 + $0x160] sm:$0xff] %v724
      %789 = vst [vmem:[%s194 + $0x168] sm:$0xff] %v725
      %790 = vst [vmem:[%s194 + $0x170] sm:$0xff] %v726
      %791 = vst [vmem:[%s194 + $0x178] sm:$0xff] %v727
      %792 = vst [vmem:[%s194 + $0x180] sm:$0xff] %v728
      %793 = vst [vmem:[%s194 + $0x188] sm:$0xff] %v729
      %794 = vst [vmem:[%s194 + $0x190] sm:$0xff] %v730
      %795 = vst [vmem:[%s194 + $0x198] sm:$0xff] %v731
      %796 = vst [vmem:[%s194 + $0x1a0] sm:$0xff] %v732
      %797 = vst [vmem:[%s194 + $0x1a8] sm:$0xff] %v733
      %798 = vst [vmem:[%s194 + $0x1b0] sm:$0xff] %v734
      %799 = vst [vmem:[%s194 + $0x1b8] sm:$0xff] %v735
      %800 = vst [vmem:[%s194 + $0x1c0] sm:$0xff] %v736
      %801 = vst [vmem:[%s194 + $0x1c8] sm:$0xff] %v737
      %802 = vst [vmem:[%s194 + $0x1d0] sm:$0xff] %v738
      %803 = vst [vmem:[%s194 + $0x1d8] sm:$0xff] %v739
      %804 = vst [vmem:[%s194 + $0x1e0] sm:$0xff] %v740
      %805 = vst [vmem:[%s194 + $0x1e8] sm:$0xff] %v741
      %806 = vst [vmem:[%s194 + $0x1f0] sm:$0xff] %v742
      %807 = vst [vmem:[%s194 + $0x1f8] sm:$0xff] %v743
      %s808 = smul.u32 32, %s17
      %p809 = scmp.lt.s32.totalorder %s18, 1
      %s810 = scalar_select %p809, %s18, 1
      %p811 = scmp.lt.s32.totalorder %s808, 31
      %s812 = scalar_select %p811, %s808, 31
      %s813 = smul.addr %s812, 2
      %s814 = smul.addr %s810, 64
      %s815 = sadd.s32 %s813, %s814
      %s816 = smul.addr %s815, 8
      %s817 = scalar_lea.vmem %s2, %s816
      // Predicated region
      $region29: #{learned_3d_positional_encoding.1} parent=27 // pred_check
        %p818 = pneg %p97
      $region30: #{learned_3d_positional_encoding.1} parent=27 // pred_check_branch
        %820 = sbr.rel (%p818) target = $region32
      $region31: #{learned_3d_positional_encoding.1} parent=27 // pred_region
        %s821 = smul.u32 32, %s17
      $region32: #{learned_3d_positional_encoding.1} parent=27 // pred_fallthru
        _
    $region28: #{learned_3d_positional_encoding.1} parent=5 // pred_fallthru
      _
    %p822 = scmp.le.s32.totalorder 2, %s8
    // Predicated region
    $region33: #{learned_3d_positional_encoding.1} parent=5 // pred_check
      %p823 = pneg %p822
    $region34: #{learned_3d_positional_encoding.1} parent=5 // pred_check_branch
      %825 = sbr.rel (%p823) target = $region36
    $region35: #{learned_3d_positional_encoding.1} parent=5 // pred_region
      %s826 = ssub.s32 %s8, 2
      // Predicated region
      $region37: #{learned_3d_positional_encoding.1} parent=35 // pred_check
        %p827 = pneg %p103
      $region38: #{learned_3d_positional_encoding.1} parent=35 // pred_check_branch
        %829 = sbr.rel (%p827) target = $region40
      $region39: #{learned_3d_positional_encoding.1} parent=35 // pred_region
        %s830 = smul.u32 32, %s19
        %p831 = scmp.lt.s32.totalorder %s20, 1
        %s832 = scalar_select %p831, %s20, 1
        %p833 = scmp.lt.s32.totalorder %s830, 31
        %s834 = scalar_select %p833, %s830, 31
        %s835 = smul.addr %s834, 2
        %s836 = smul.addr %s832, 64
        %s837 = sadd.s32 %s835, %s836
        %s838 = smul.addr %s837, 8
        %s839 = scalar_lea.vmem %s2, %s838
      $region40: #{learned_3d_positional_encoding.1} parent=35 // pred_fallthru
        _
    $region36: #{learned_3d_positional_encoding.1} parent=5 // pred_fallthru
      _
  $region6: #{learned_3d_positional_encoding.1} parent=0 // loop_footer
    %s12 = sadd.s32 1, %s8
  $region7: #{learned_3d_positional_encoding.1} parent=0 // loop_footer_branch
    %7 = sbr.rel target = $region3
  $region8: #{learned_3d_positional_encoding.1} parent=0 // loop_exit
    _

</llo_original>
